<compile_context>
chip_gen: v7x
topology: tpu7x:2x2x1
jax: 0.10.0
libtpu: 0.0.40
codegen_flags: <defaults>
</compile_context>

<pallas_src>
import functools
import math

import jax
import jax.numpy as jnp
from jax.experimental import pallas as pl
from jax.experimental.pallas import tpu as pltpu


def _round_up(x, m):
    return (x + m - 1) // m * m


def _round_down(x, m):
    return (x // m) * m


def _choose_p_chunk(P, p_chunk_max):
    """Largest chunk size <= p_chunk_max that divides P.

    Chunks must be full: garbage prototypes (unlike garbage batch lanes) would
    corrupt real results, so we never let the P axis run out of bounds.
    """
    if P <= p_chunk_max:
        return P
    for c in range(p_chunk_max, 0, -1):
        if P % c == 0:
            return c
    return 1


def _dempster_kernel(x_ref, o_ref, acc_ref, *, pc, n_chunks, renorm_every):
    """One grid step: combine `pc` prototypes into the lane-resident state.

    x_ref:   (pc, D, tb) VMEM tile  -- batch on the lane axis.
    o_ref:   (D, tb)     output tile (written only on the last prototype chunk).
    acc_ref: (D, tb) f32 accumulator, resident across the prototype-chunk axis.

    Normalization is deferred: the update is degree-1 homogeneous in
    (m1, omega1), so any per-lane rescaling — including the approx renorms that
    only guard fp32 range — cancels exactly in the single exact final
    normalization.
    """

    def combine_chunk(m1, start):
        om1 = m1[-1:, :]                                  # (1, tb)
        done = 0
        for j in range(start, pc):
            m2 = x_ref[j].astype(jnp.float32)             # (D, tb) per-step ref read
            om2 = m2[-1:, :]                              # (1, tb)
            m1 = m1 * m2 + m1 * om2 + om1 * m2            # unnormalized Dempster update
            om1 = m1[-1:, :]
            done += 1
            # fp32 range guard only; approx reciprocal runs on the (idle) EUP
            # slot and its error cancels in the exact final normalization.
            if done % renorm_every == 0 and j != pc - 1:
                m1 = m1 * pl.reciprocal(
                    jnp.sum(m1, axis=0, keepdims=True), approx=True)
                om1 = m1[-1:, :]
        return m1

    def normalize(m1, *, exact):
        s = jnp.sum(m1, axis=0, keepdims=True)            # (1, tb)
        return m1 * pl.reciprocal(s, approx=not exact)

    if n_chunks == 1:
        # Single chunk: no accumulator round-trip needed.
        m1 = combine_chunk(x_ref[0].astype(jnp.float32), 1)
        o_ref[...] = normalize(m1, exact=True).astype(o_ref.dtype)
        return

    p = pl.program_id(1)

    @pl.when(p == 0)
    def _():
        m1 = combine_chunk(x_ref[0].astype(jnp.float32), 1)
        acc_ref[...] = normalize(m1, exact=False)

    @pl.when(p != 0)
    def _():
        m1 = combine_chunk(acc_ref[...], 0)
        acc_ref[...] = normalize(m1, exact=False)

    @pl.when(p == n_chunks - 1)
    def _():
        o_ref[...] = normalize(acc_ref[...], exact=True).astype(o_ref.dtype)


def dempster_layer_pdb(x, *, max_batch_tile=8192, p_chunk_max=16,
                       renorm_every=4, vmem_budget_bytes=16 * 1024 * 1024):
    """Core kernel. x: (P, D, B) with batch on the last (lane) axis.

    Returns the combined (normalized) masses, shape (D, B), dtype of x.
    Calling this directly (data already in (P, D, B)) avoids the relayout
    transpose in `dempster_layer`.
    """
    P, D, B = x.shape
    pc = _choose_p_chunk(P, p_chunk_max)
    n_chunks = P // pc

    # ---- batch tile: as big as the VMEM budget allows, multiple of 128 ------
    d_pad = _round_up(D, 8)                       # sublane padding in VMEM
    itm = x.dtype.itemsize
    # 2x double-buffered input block + f32 accumulator + 2x output block
    bytes_per_lane = 2 * pc * d_pad * itm + d_pad * 4 + 2 * d_pad * itm
    vmem_tb = max(_round_down(vmem_budget_bytes // bytes_per_lane, 128), 128)
    tb_cap = max(min(max_batch_tile, vmem_tb), 128)

    if B > tb_cap:
        tb = tb_cap                               # >= 2 programs automatically
    elif B >= 512:
        # Split one big block in two so both v7x TensorCores get work
        # (costs one ~0.35us grid step on 1-TC chips — negligible).
        tb = min(tb_cap, _round_up(pl.cdiv(B, 2), 128))
    else:
        tb = B                                    # full-extent block, always legal
    grid_b = pl.cdiv(B, tb)                       # last block masked; no host pad

    kernel = functools.partial(_dempster_kernel, pc=pc, n_chunks=n_chunks,
                               renorm_every=renorm_every)
    return pl.pallas_call(
        kernel,
        out_shape=jax.ShapeDtypeStruct((D, B), x.dtype),
        grid_spec=pltpu.PrefetchScalarGridSpec(
            num_scalar_prefetch=0,
            grid=(grid_b, n_chunks),              # prototype (reduction) axis last
            in_specs=[pl.BlockSpec((pc, D, tb), lambda b, p: (p, 0, b))],
            out_specs=pl.BlockSpec((D, tb), lambda b, p: (0, b)),
            scratch_shapes=[pltpu.VMEM((D, tb), jnp.float32)],
        ),
        compiler_params=pltpu.CompilerParams(
            dimension_semantics=("parallel", "arbitrary"),
            vmem_limit_bytes=32 * 1024 * 1024,
        ),
    )(x)


def dempster_layer(inputs, n_prototypes, num_class, **kwargs):
    """inputs: (..., P, D) with P == n_prototypes, D == num_class + 1.

    Returns (..., D): sequential Dempster combination over all prototypes,
    matching Dempster_layer.forward (works for f32 or bf16 inputs; the kernel
    accumulates in f32 either way).
    """
    *lead, P, D = inputs.shape
    assert P == n_prototypes and D == num_class + 1
    if P == 1:                                    # torch loop never runs: pass-through
        return inputs[..., 0, :]

    B = math.prod(lead) if lead else 1

    # Relayout batch onto the lane axis: (B, P, D) -> (P, D, B).
    # TODO(synk): produce (P, D, B) upstream / fuse this transpose into the
    # kernel input DMA — it is ~half of the HBM traffic of this memory-bound op.
    x = jnp.transpose(inputs.reshape(B, P, D), (1, 2, 0))

    out = dempster_layer_pdb(x, **kwargs)         # (D, B)
    out = jnp.transpose(out, (1, 0))              # (B, D)
    return out.reshape(*lead, D)


def dempster_layer_ref(inputs, n_prototypes):
    """Pure-JAX reference mirroring the torch forward exactly."""
    m1 = inputs[..., 0, :]
    omega1 = inputs[..., 0, -1:]
    for i in range(n_prototypes - 1):
        m2 = inputs[..., i + 1, :]
        omega2 = inputs[..., i + 1, -1:]
        combine = m1 * m2 + m1 * omega2 + omega1 * m2
        combine = combine / jnp.sum(combine, axis=-1, keepdims=True)
        m1 = combine
        omega1 = combine[..., -1:]
    return m1


if __name__ == "__main__":
    n_prototypes = 8
    num_class = 4
    P, D = n_prototypes, num_class + 1
    k1, k2, k3, k4 = jax.random.split(jax.random.PRNGKey(0), 4)

    # 1) Basic path: single prototype chunk, single (unaligned) batch block.
    B = 16
    x = jax.random.uniform(k1, (B, P, D), jnp.float32, minval=0.05, maxval=1.0)
    out = jax.block_until_ready(dempster_layer(x, n_prototypes, num_class))
    ref = dempster_layer_ref(x, n_prototypes)
    assert out.shape == (B, D)
    assert jnp.allclose(out, ref, atol=1e-5, rtol=1e-4), "mismatch (basic)"

    # 2) Multiple batch blocks with a masked (non-divisible) tail — no host pad.
    B2 = 200
    x2 = jax.random.uniform(k2, (B2, P, D), jnp.float32, minval=0.05, maxval=1.0)
    out2 = jax.block_until_ready(
        dempster_layer(x2, n_prototypes, num_class, max_batch_tile=128))
    ref2 = dempster_layer_ref(x2, n_prototypes)
    assert out2.shape == (B2, D)
    assert jnp.allclose(out2, ref2, atol=1e-5, rtol=1e-4), "mismatch (masked tail)"

    # 3) Prototype-chunked accumulator path (P > p_chunk_max) with small masses
    #    (exercises the periodic renorm guard against fp32 underflow).
    P3 = 40
    x3 = jax.random.uniform(k3, (64, P3, D), jnp.float32, minval=1e-3, maxval=5e-3)
    out3 = jax.block_until_ready(dempster_layer(x3, P3, num_class))
    ref3 = dempster_layer_ref(x3, P3)
    assert out3.shape == (64, D)
    assert jnp.allclose(out3, ref3, atol=1e-5, rtol=5e-4), "mismatch (chunked P)"

    # 4) Large-batch split into >=2 programs (v7x two-TensorCore path).
    B4 = 640
    x4 = jax.random.uniform(k4, (B4, P, D), jnp.float32, minval=0.05, maxval=1.0)
    out4 = jax.block_until_ready(dempster_layer(x4, n_prototypes, num_class))
    ref4 = dempster_layer_ref(x4, n_prototypes)
    assert out4.shape == (B4, D)
    assert jnp.allclose(out4, ref4, atol=1e-5, rtol=1e-4), "mismatch (split batch)"

    print("KERNEL_OK")
</pallas_src>

<mosaic_0001>
module attributes {stable_mosaic.version = 11 : i64} {
  func.func @_dempster_kernel(%arg0: i32, %arg1: i32, %arg2: memref<8x5x16xf32, #tpu.memory_space<vmem>>, %arg3: memref<5x16xf32, #tpu.memory_space<vmem>>, %arg4: memref<5x16xf32, #tpu.memory_space<vmem>>) attributes {dimension_semantics = [#tpu.dimension_semantics<parallel>, #tpu.dimension_semantics<arbitrary>], iteration_bounds = array<i64: 1, 1>, scalar_prefetch = 0 : i64, scratch_operands = 1 : i64, tpu.core_type = #tpu.core_type<tc>, window_params = [{transform_indices = @transform_0, window_bounds = array<i64: 8, 5, 16>}, {transform_indices = @transform_1, window_bounds = array<i64: 5, 16>}]} {
    %c0 = arith.constant 0 : index
    %c0_0 = arith.constant 0 : index
    %c0_1 = arith.constant 0 : index
    %0 = vector.load %arg2[%c0, %c0_0, %c0_1] : memref<8x5x16xf32, #tpu.memory_space<vmem>>, vector<1x5x16xf32>
    %1 = vector.shape_cast %0 : vector<1x5x16xf32> to vector<5x16xf32>
    %2 = vector.extract_strided_slice %1 {offsets = [4, 0], sizes = [1, 16], strides = [1, 1]} : vector<5x16xf32> to vector<1x16xf32>
    %c1 = arith.constant 1 : index
    %c0_2 = arith.constant 0 : index
    %c0_3 = arith.constant 0 : index
    %3 = vector.load %arg2[%c1, %c0_2, %c0_3] : memref<8x5x16xf32, #tpu.memory_space<vmem>>, vector<1x5x16xf32>
    %4 = vector.shape_cast %3 : vector<1x5x16xf32> to vector<5x16xf32>
    %5 = vector.extract_strided_slice %4 {offsets = [4, 0], sizes = [1, 16], strides = [1, 1]} : vector<5x16xf32> to vector<1x16xf32>
    %6 = arith.mulf %1, %4 : vector<5x16xf32>
    %7 = vector.broadcast %5 : vector<1x16xf32> to vector<5x16xf32>
    %8 = arith.mulf %1, %7 : vector<5x16xf32>
    %9 = arith.addf %6, %8 : vector<5x16xf32>
    %10 = vector.broadcast %2 : vector<1x16xf32> to vector<5x16xf32>
    %11 = arith.mulf %10, %4 : vector<5x16xf32>
    %12 = arith.addf %9, %11 : vector<5x16xf32>
    %13 = vector.extract_strided_slice %12 {offsets = [4, 0], sizes = [1, 16], strides = [1, 1]} : vector<5x16xf32> to vector<1x16xf32>
    %c2 = arith.constant 2 : index
    %c0_4 = arith.constant 0 : index
    %c0_5 = arith.constant 0 : index
    %14 = vector.load %arg2[%c2, %c0_4, %c0_5] : memref<8x5x16xf32, #tpu.memory_space<vmem>>, vector<1x5x16xf32>
    %15 = vector.shape_cast %14 : vector<1x5x16xf32> to vector<5x16xf32>
    %16 = vector.extract_strided_slice %15 {offsets = [4, 0], sizes = [1, 16], strides = [1, 1]} : vector<5x16xf32> to vector<1x16xf32>
    %17 = arith.mulf %12, %15 : vector<5x16xf32>
    %18 = vector.broadcast %16 : vector<1x16xf32> to vector<5x16xf32>
    %19 = arith.mulf %12, %18 : vector<5x16xf32>
    %20 = arith.addf %17, %19 : vector<5x16xf32>
    %21 = vector.broadcast %13 : vector<1x16xf32> to vector<5x16xf32>
    %22 = arith.mulf %21, %15 : vector<5x16xf32>
    %23 = arith.addf %20, %22 : vector<5x16xf32>
    %24 = vector.extract_strided_slice %23 {offsets = [4, 0], sizes = [1, 16], strides = [1, 1]} : vector<5x16xf32> to vector<1x16xf32>
    %c3 = arith.constant 3 : index
    %c0_6 = arith.constant 0 : index
    %c0_7 = arith.constant 0 : index
    %25 = vector.load %arg2[%c3, %c0_6, %c0_7] : memref<8x5x16xf32, #tpu.memory_space<vmem>>, vector<1x5x16xf32>
    %26 = vector.shape_cast %25 : vector<1x5x16xf32> to vector<5x16xf32>
    %27 = vector.extract_strided_slice %26 {offsets = [4, 0], sizes = [1, 16], strides = [1, 1]} : vector<5x16xf32> to vector<1x16xf32>
    %28 = arith.mulf %23, %26 : vector<5x16xf32>
    %29 = vector.broadcast %27 : vector<1x16xf32> to vector<5x16xf32>
    %30 = arith.mulf %23, %29 : vector<5x16xf32>
    %31 = arith.addf %28, %30 : vector<5x16xf32>
    %32 = vector.broadcast %24 : vector<1x16xf32> to vector<5x16xf32>
    %33 = arith.mulf %32, %26 : vector<5x16xf32>
    %34 = arith.addf %31, %33 : vector<5x16xf32>
    %35 = vector.extract_strided_slice %34 {offsets = [4, 0], sizes = [1, 16], strides = [1, 1]} : vector<5x16xf32> to vector<1x16xf32>
    %c4 = arith.constant 4 : index
    %c0_8 = arith.constant 0 : index
    %c0_9 = arith.constant 0 : index
    %36 = vector.load %arg2[%c4, %c0_8, %c0_9] : memref<8x5x16xf32, #tpu.memory_space<vmem>>, vector<1x5x16xf32>
    %37 = vector.shape_cast %36 : vector<1x5x16xf32> to vector<5x16xf32>
    %38 = vector.extract_strided_slice %37 {offsets = [4, 0], sizes = [1, 16], strides = [1, 1]} : vector<5x16xf32> to vector<1x16xf32>
    %39 = arith.mulf %34, %37 : vector<5x16xf32>
    %40 = vector.broadcast %38 : vector<1x16xf32> to vector<5x16xf32>
    %41 = arith.mulf %34, %40 : vector<5x16xf32>
    %42 = arith.addf %39, %41 : vector<5x16xf32>
    %43 = vector.broadcast %35 : vector<1x16xf32> to vector<5x16xf32>
    %44 = arith.mulf %43, %37 : vector<5x16xf32>
    %45 = arith.addf %42, %44 : vector<5x16xf32>
    %cst = arith.constant dense<0.000000e+00> : vector<16xf32>
    %46 = vector.multi_reduction <add>, %45, %cst [0] : vector<5x16xf32> to vector<16xf32>
    %47 = vector.shape_cast %46 : vector<16xf32> to vector<1x16xf32>
    %48 = tpu.reciprocal %47 {approx = true} : vector<1x16xf32> -> vector<1x16xf32>
    %49 = vector.broadcast %48 : vector<1x16xf32> to vector<5x16xf32>
    %50 = arith.mulf %45, %49 : vector<5x16xf32>
    %51 = vector.extract_strided_slice %50 {offsets = [4, 0], sizes = [1, 16], strides = [1, 1]} : vector<5x16xf32> to vector<1x16xf32>
    %c5 = arith.constant 5 : index
    %c0_10 = arith.constant 0 : index
    %c0_11 = arith.constant 0 : index
    %52 = vector.load %arg2[%c5, %c0_10, %c0_11] : memref<8x5x16xf32, #tpu.memory_space<vmem>>, vector<1x5x16xf32>
    %53 = vector.shape_cast %52 : vector<1x5x16xf32> to vector<5x16xf32>
    %54 = vector.extract_strided_slice %53 {offsets = [4, 0], sizes = [1, 16], strides = [1, 1]} : vector<5x16xf32> to vector<1x16xf32>
    %55 = arith.mulf %50, %53 : vector<5x16xf32>
    %56 = vector.broadcast %54 : vector<1x16xf32> to vector<5x16xf32>
    %57 = arith.mulf %50, %56 : vector<5x16xf32>
    %58 = arith.addf %55, %57 : vector<5x16xf32>
    %59 = vector.broadcast %51 : vector<1x16xf32> to vector<5x16xf32>
    %60 = arith.mulf %59, %53 : vector<5x16xf32>
    %61 = arith.addf %58, %60 : vector<5x16xf32>
    %62 = vector.extract_strided_slice %61 {offsets = [4, 0], sizes = [1, 16], strides = [1, 1]} : vector<5x16xf32> to vector<1x16xf32>
    %c6 = arith.constant 6 : index
    %c0_12 = arith.constant 0 : index
    %c0_13 = arith.constant 0 : index
    %63 = vector.load %arg2[%c6, %c0_12, %c0_13] : memref<8x5x16xf32, #tpu.memory_space<vmem>>, vector<1x5x16xf32>
    %64 = vector.shape_cast %63 : vector<1x5x16xf32> to vector<5x16xf32>
    %65 = vector.extract_strided_slice %64 {offsets = [4, 0], sizes = [1, 16], strides = [1, 1]} : vector<5x16xf32> to vector<1x16xf32>
    %66 = arith.mulf %61, %64 : vector<5x16xf32>
    %67 = vector.broadcast %65 : vector<1x16xf32> to vector<5x16xf32>
    %68 = arith.mulf %61, %67 : vector<5x16xf32>
    %69 = arith.addf %66, %68 : vector<5x16xf32>
    %70 = vector.broadcast %62 : vector<1x16xf32> to vector<5x16xf32>
    %71 = arith.mulf %70, %64 : vector<5x16xf32>
    %72 = arith.addf %69, %71 : vector<5x16xf32>
    %73 = vector.extract_strided_slice %72 {offsets = [4, 0], sizes = [1, 16], strides = [1, 1]} : vector<5x16xf32> to vector<1x16xf32>
    %c7 = arith.constant 7 : index
    %c0_14 = arith.constant 0 : index
    %c0_15 = arith.constant 0 : index
    %74 = vector.load %arg2[%c7, %c0_14, %c0_15] : memref<8x5x16xf32, #tpu.memory_space<vmem>>, vector<1x5x16xf32>
    %75 = vector.shape_cast %74 : vector<1x5x16xf32> to vector<5x16xf32>
    %76 = vector.extract_strided_slice %75 {offsets = [4, 0], sizes = [1, 16], strides = [1, 1]} : vector<5x16xf32> to vector<1x16xf32>
    %77 = arith.mulf %72, %75 : vector<5x16xf32>
    %78 = vector.broadcast %76 : vector<1x16xf32> to vector<5x16xf32>
    %79 = arith.mulf %72, %78 : vector<5x16xf32>
    %80 = arith.addf %77, %79 : vector<5x16xf32>
    %81 = vector.broadcast %73 : vector<1x16xf32> to vector<5x16xf32>
    %82 = arith.mulf %81, %75 : vector<5x16xf32>
    %83 = arith.addf %80, %82 : vector<5x16xf32>
    %cst_16 = arith.constant dense<0.000000e+00> : vector<16xf32>
    %84 = vector.multi_reduction <add>, %83, %cst_16 [0] : vector<5x16xf32> to vector<16xf32>
    %85 = vector.shape_cast %84 : vector<16xf32> to vector<1x16xf32>
    %86 = tpu.reciprocal %85 : vector<1x16xf32> -> vector<1x16xf32>
    %87 = vector.broadcast %86 : vector<1x16xf32> to vector<5x16xf32>
    %88 = arith.mulf %83, %87 : vector<5x16xf32>
    %c0_17 = arith.constant 0 : index
    %c0_18 = arith.constant 0 : index
    %89 = vector.load %arg3[%c0_17, %c0_18] : memref<5x16xf32, #tpu.memory_space<vmem>>, vector<5x16xf32>
    tpu.vector_store %arg3[%c0_17, %c0_18], %88 {strides = array<i32>} : memref<5x16xf32, #tpu.memory_space<vmem>>, vector<5x16xf32>,
    return
  }
  func.func @transform_0(%arg0: i32, %arg1: i32) -> (i32, i32, i32) {
    %c0_i32 = arith.constant 0 : i32
    %c0_i32_0 = arith.constant 0 : i32
    return %arg1, %c0_i32, %arg0 : i32, i32, i32
  }
  func.func @transform_1(%arg0: i32, %arg1: i32) -> (i32, i32) {
    %c0_i32 = arith.constant 0 : i32
    %c0_i32_0 = arith.constant 0 : i32
    return %c0_i32, %arg0 : i32, i32
  }
}

</mosaic_0001>

<llo_original>
// kernel: tpu_custom_call.1
$region0: #{tpu_custom_call.1}
  #allocation0 [shape = 'u32[]', space=smem, size = 0x4, offset = 0x4, fixed_abs, tag = 'smem constant byte address 0x4 - core index']
  #allocation1 [shape = 'u32[144,128]{1,0:T(1,128)}', space=vmem, size = 0x12000, scoped, tag = 'internal scratch']
  #allocation2 [shape = 'f32[5,16]{1,0:T(8,128)}', space=vmem, size = 0x1000, scoped, tag = 'scratch operand']
  %s0 = inlined_call_operand.vmem [shape: f32[8,5,16], index: 0, kind: input, shape index: {}]
  %s1 = inlined_call_operand.hbm [shape: f32[5,16], index: 1, kind: output, shape index: {}]
  %s2 = sld [smem:[#allocation0]]
  $region14: #{tpu_custom_call.1} parent=0
    _
  %s4 = ssub.s32 1, %s2
  %s5 = scalar_select 0, %s4, %s2
  $region1: #{tpu_custom_call.1} parent=0
    #allocation3 [shape = 'u8[4096]{0}', space=vmem, size = 0x1000, scoped, tag = 'output window, operand 0, single buffered']
    #allocation4 [shape = 's32[1]{0}', space=sflag, size = 0x4, scoped, tag = 'scoped memory for tpu_custom_call.1']
    %6 = vsyncpa [#allocation4], 0
    // Predicated region
    $region2: #{tpu_custom_call.1} parent=1 // pred_check
      _
    $region3: #{tpu_custom_call.1} parent=1 // pred_check_branch
      %8 = sbr.rel (0) target = $region5
    $region4: #{tpu_custom_call.1} parent=1 // pred_region
      _
    $region5: #{tpu_custom_call.1} parent=1 // pred_fallthru
      _
    %v9 = vld [vmem:[%s0] sm:$0x1f]
    %s10 = scalar_lea.vmem %s0, 8
    %v11 = vld [vmem:[%s10] sm:$0x1f]
    %v12 = vmul.f32 %v9, %v11
    %v13 = vlaneseq
    %v14 = vshrl.u32 %v13, 7
    %v15 = vsub.s32 4, %v14
    %v16 = vrot.slane %v11, %v15
    %v17 = vmul.f32 %v9, %v16
    %v18 = vadd.f32 %v12, %v17
    %v19 = vlaneseq
    %v20 = vshrl.u32 %v19, 7
    %v21 = vsub.s32 4, %v20
    %v22 = vrot.slane %v9, %v21
    %v23 = vmul.f32 %v22, %v11
    %v24 = vadd.f32 %v18, %v23
    %s25 = scalar_lea.vmem %s0, 16
    %v26 = vld [vmem:[%s25] sm:$0x1f]
    %v27 = vmul.f32 %v24, %v26
    %v28 = vlaneseq
    %v29 = vshrl.u32 %v28, 7
    %v30 = vsub.s32 4, %v29
    %v31 = vrot.slane %v26, %v30
    %v32 = vmul.f32 %v24, %v31
    %v33 = vadd.f32 %v27, %v32
    %v34 = vlaneseq
    %v35 = vshrl.u32 %v34, 7
    %v36 = vsub.s32 4, %v35
    %v37 = vrot.slane %v24, %v36
    %v38 = vmul.f32 %v37, %v26
    %v39 = vadd.f32 %v33, %v38
    %s40 = scalar_lea.vmem %s0, 24
    %v41 = vld [vmem:[%s40] sm:$0x1f]
    %v42 = vmul.f32 %v39, %v41
    %v43 = vlaneseq
    %v44 = vshrl.u32 %v43, 7
    %v45 = vsub.s32 4, %v44
    %v46 = vrot.slane %v41, %v45
    %v47 = vmul.f32 %v39, %v46
    %v48 = vadd.f32 %v42, %v47
    %v49 = vlaneseq
    %v50 = vshrl.u32 %v49, 7
    %v51 = vsub.s32 4, %v50
    %v52 = vrot.slane %v39, %v51
    %v53 = vmul.f32 %v52, %v41
    %v54 = vadd.f32 %v48, %v53
    %s55 = scalar_lea.vmem %s0, 32
    %v56 = vld [vmem:[%s55] sm:$0x1f]
    %v57 = vmul.f32 %v54, %v56
    %v58 = vlaneseq
    %v59 = vshrl.u32 %v58, 7
    %v60 = vsub.s32 4, %v59
    %v61 = vrot.slane %v56, %v60
    %v62 = vmul.f32 %v54, %v61
    %v63 = vadd.f32 %v57, %v62
    %v64 = vlaneseq
    %v65 = vshrl.u32 %v64, 7
    %v66 = vsub.s32 4, %v65
    %v67 = vrot.slane %v54, %v66
    %v68 = vmul.f32 %v67, %v56
    %v69 = vadd.f32 %v63, %v68
    %vm70 = vcmask 126976
    %v71 = vsel %vm70, %v69, 0.0
    %v72 = vrot.slane %v71, 4
    %v73 = vadd.f32 %v71, %v72
    %v74 = vrot.slane %v73, 2
    %v75 = vadd.f32 %v73, %v74
    %v76 = vrot.slane %v75, 1
    %v77 = vadd.f32 %v75, %v76
    %v78 = vrcp.pop %v77
    %v79 = vmul.f32 %v69, %v78
    %s80 = scalar_lea.vmem %s0, 40
    %v81 = vld [vmem:[%s80] sm:$0x1f]
    %v82 = vmul.f32 %v79, %v81
    %v83 = vlaneseq
    %v84 = vshrl.u32 %v83, 7
    %v85 = vsub.s32 4, %v84
    %v86 = vrot.slane %v81, %v85
    %v87 = vmul.f32 %v79, %v86
    %v88 = vadd.f32 %v82, %v87
    %v89 = vlaneseq
    %v90 = vshrl.u32 %v89, 7
    %v91 = vsub.s32 4, %v90
    %v92 = vrot.slane %v79, %v91
    %v93 = vmul.f32 %v92, %v81
    %v94 = vadd.f32 %v88, %v93
    %s95 = scalar_lea.vmem %s0, 48
    %v96 = vld [vmem:[%s95] sm:$0x1f]
    %v97 = vmul.f32 %v94, %v96
    %v98 = vlaneseq
    %v99 = vshrl.u32 %v98, 7
    %v100 = vsub.s32 4, %v99
    %v101 = vrot.slane %v96, %v100
    %v102 = vmul.f32 %v94, %v101
    %v103 = vadd.f32 %v97, %v102
    %v104 = vlaneseq
    %v105 = vshrl.u32 %v104, 7
    %v106 = vsub.s32 4, %v105
    %v107 = vrot.slane %v94, %v106
    %v108 = vmul.f32 %v107, %v96
    %v109 = vadd.f32 %v103, %v108
    %s110 = scalar_lea.vmem %s0, 56
    %v111 = vld [vmem:[%s110] sm:$0x1f]
    %v112 = vmul.f32 %v109, %v111
    %v113 = vlaneseq
    %v114 = vshrl.u32 %v113, 7
    %v115 = vsub.s32 4, %v114
    %v116 = vrot.slane %v111, %v115
    %v117 = vmul.f32 %v109, %v116
    %v118 = vadd.f32 %v112, %v117
    %v119 = vlaneseq
    %v120 = vshrl.u32 %v119, 7
    %v121 = vsub.s32 4, %v120
    %v122 = vrot.slane %v109, %v121
    %v123 = vmul.f32 %v122, %v111
    %v124 = vadd.f32 %v118, %v123
    %v125 = vsel %vm70, %v124, 0.0
    %v126 = vrot.slane %v125, 4
    %v127 = vadd.f32 %v125, %v126
    %v128 = vrot.slane %v127, 2
    %v129 = vadd.f32 %v127, %v128
    %v130 = vrot.slane %v129, 1
    %v131 = vadd.f32 %v129, %v130
    %v132 = vrcp.pop %v131
    %v133 = vmul.f32 %v124, %v132
    %134 = vst.msk [vmem:[#allocation3] sm:$0x1f] %vm70, %v133
    // Predicated region
    $region6: #{tpu_custom_call.1} parent=1 // pred_check
      _
    $region7: #{tpu_custom_call.1} parent=1 // pred_check_branch
      %136 = sbr.rel (0) target = $region9
    $region8: #{tpu_custom_call.1} parent=1 // pred_region
      %s138 = ssub.s32 128, 128
      %139 = vsyncadd [#allocation4], %s138
      %s141 = sshll.u32 [#allocation3], 4
      %s142 = int_to_ptr.vmem [resolvable:$true] %s141
      %144 = dma.vmem_to_hbm [thread:$0]  %s142, 128, %s1, [#allocation4]
    $region9: #{tpu_custom_call.1} parent=1 // pred_fallthru
      _
    // Predicated region
    $region10: #{tpu_custom_call.1} parent=1 // pred_check
      _
    $region11: #{tpu_custom_call.1} parent=1 // pred_check_branch
      %146 = sbr.rel (0) target = $region13
    $region12: #{tpu_custom_call.1} parent=1 // pred_region
      %147 = dma.done [#allocation4], 128
    $region13: #{tpu_custom_call.1} parent=1 // pred_fallthru
      _
    %148 = vsyncpa [#allocation4], 1

</llo_original>
